<compile_context>
chip_gen: v7x
topology: tpu7x:2x2x1
jax: 0.10.0
libtpu: 0.0.40
codegen_flags: <defaults>
</compile_context>

<pallas_src>
import jax
import jax.numpy as jnp
from jax.experimental import pallas as pl
from jax.experimental.pallas import tpu as pltpu


def _round_up(x, m):
    return ((x + m - 1) // m) * m


def _hw_params():
    """Generation-aware tile caps and scoped-VMEM budget."""
    vmem_cap = 64 * 1024 * 1024  # conservative default (v7x-like per-core VMEM)
    try:
        info = pltpu.get_tpu_info()
        vmem_cap = int(getattr(info, "vmem_capacity_bytes", vmem_cap))
    except Exception:
        pass
    if vmem_cap >= 128 * 1024 * 1024:
        # v5e / v6e: 128 MiB VMEM, 1 TensorCore -> big tiles, generous limit.
        return dict(vmem_limit=96 * 1024 * 1024, tm_cap=1024, tk_cap=2048,
                    tn_cap=512, two_cores=False)
    # v7x-like: 64 MiB per TensorCore, 2 TCs/chip -> headroom + smaller tiles,
    # and try to expose >=2 parallel output tiles so both cores get work.
    return dict(vmem_limit=48 * 1024 * 1024, tm_cap=512, tk_cap=1024,
                tn_cap=256, two_cores=True)


def _sparse_linear_kernel(x_ref, w_ref, b_ref, o_ref):
    """One (batch-tile, out-tile) output block, reduced over the K grid axis.

    x_ref: (tn, tk) bf16   activations, batch-major
    w_ref: (tk, tm) bf16   weight tile, canonical (K, N) MXU layout
    b_ref: (1,  tm) f32    lane-dense bias row
    o_ref: (tn, tm) f32    lane-dense output block; VMEM-resident across the K
                           axis, used directly as the f32 accumulator.
    """
    @pl.when(pl.program_id(2) == 0)
    def _init():
        o_ref[...] = jnp.broadcast_to(b_ref[...], o_ref.shape)

    o_ref[...] += jnp.dot(x_ref[...], w_ref[...],
                          preferred_element_type=jnp.float32)


def _sparse_linear_small_kernel(x_ref, w_ref, b_ref, o_ref):
    """Single-block path (no grid) for problems that fit one tile."""
    o_ref[...] = jnp.dot(x_ref[...], w_ref[...],
                         preferred_element_type=jnp.float32) + b_ref[...]


def preprocess_sparse_linear(weight_dense, bias):
    """One-time per-weight preprocessing (hoisted off the forward hot path).

    weight_dense: (out_f, in_f) f32  -- densified COO weight (mask * values)
    bias:         (out_f, 1) f32 or None
    Returns padded/cast device arrays + tiling plan, reused on every forward.
    """
    out_f, in_f = weight_dense.shape
    hw = _hw_params()

    tm = min(hw["tm_cap"], _round_up(out_f, 128))   # out_features (lane) tile
    tk = min(hw["tk_cap"], _round_up(in_f, 128))    # in_features (reduction) tile
    m_pad = _round_up(out_f, tm)
    k_pad = _round_up(in_f, tk)

    # v7x: if the M axis would be a single tile, split it so the two "parallel"
    # grid axes can shard across both TensorCores.
    if hw["two_cores"] and m_pad // tm < 2 and m_pad % 256 == 0:
        tm = m_pad // 2

    # Canonical (K, N) weight layout for the MXU, padded + bf16 cast, done ONCE.
    w_kn = jnp.pad(weight_dense.astype(jnp.bfloat16).T,
                   ((0, k_pad - in_f), (0, m_pad - out_f)))
    if bias is None:
        b_row = jnp.zeros((1, m_pad), jnp.float32)
    else:
        b_row = jnp.pad(jnp.asarray(bias, jnp.float32).reshape(1, out_f),
                        ((0, 0), (0, m_pad - out_f)))

    return dict(w_kn=w_kn, b_row=b_row, out_f=out_f, in_f=in_f,
                tm=tm, tk=tk, hw=hw)


def _sparse_linear_bn(x_bn, params):
    """out[batch, out_f] = x_bn @ W.T + bias  (bf16 operands, f32 accumulate)."""
    batch, in_f = x_bn.shape
    assert in_f == params["in_f"]
    w_kn, b_row = params["w_kn"], params["b_row"]
    k_pad, m_pad = w_kn.shape
    out_f, tm, tk, hw = params["out_f"], params["tm"], params["tk"], params["hw"]

    tn = min(hw["tn_cap"], _round_up(batch, 16))    # batch (sublane) tile
    n_pad = _round_up(batch, tn)

    # Only the small activation is padded/cast per call; zero K-padding is inert.
    x_p = jnp.pad(x_bn.astype(jnp.bfloat16),
                  ((0, n_pad - batch), (0, k_pad - in_f)))

    grid = (n_pad // tn, m_pad // tm, k_pad // tk)

    if grid == (1, 1, 1):
        # Tiny problem: one VMEM-resident block, no grid / pipeline overhead.
        out_p = pl.pallas_call(
            _sparse_linear_small_kernel,
            out_shape=jax.ShapeDtypeStruct((n_pad, m_pad), jnp.float32),
        )(x_p, w_kn, b_row)
        return out_p[:batch, :out_f]

    flops = 2 * n_pad * m_pad * k_pad
    bytes_accessed = ((x_p.size + w_kn.size) * 2 + b_row.size * 4
                      + n_pad * m_pad * 4)

    out_p = pl.pallas_call(
        _sparse_linear_kernel,
        out_shape=jax.ShapeDtypeStruct((n_pad, m_pad), jnp.float32),
        grid_spec=pltpu.PrefetchScalarGridSpec(
            num_scalar_prefetch=0,
            grid=grid,
            in_specs=[
                pl.BlockSpec((tn, tk), lambda i, j, k: (i, k)),   # X  (batch, K)
                pl.BlockSpec((tk, tm), lambda i, j, k: (k, j)),   # W  (K, out_f)
                pl.BlockSpec((1, tm), lambda i, j, k: (0, j)),    # bias row
            ],
            out_specs=pl.BlockSpec((tn, tm), lambda i, j, k: (i, j)),
        ),
        compiler_params=pltpu.CompilerParams(
            dimension_semantics=("parallel", "parallel", "arbitrary"),
            vmem_limit_bytes=hw["vmem_limit"],
        ),
        cost_estimate=pl.CostEstimate(
            flops=flops, transcendentals=0, bytes_accessed=bytes_accessed),
    )(x_p, w_kn, b_row)

    return out_p[:batch, :out_f]


def sparse_linear_forward(params, inp, transpose=False):
    """PruneFL SparseLinear.forward.

    params: output of preprocess_sparse_linear (call once per weight, reuse).
    inp:    (in_f, N) if not transpose  -> returns (out_f, N)
            (N, in_f) if transpose      -> returns (N, out_f)
    """
    # Kernel always computes lane-dense out[batch, out_features]; the
    # transpose=True path therefore needs no wrapper transposes at all.
    x_bn = inp if transpose else inp.T
    out_bn = _sparse_linear_bn(x_bn, params)
    return out_bn if transpose else out_bn.T


def make_sparse_params(key, out_features, in_features, density=0.3):
    """Deterministic synthetic 'sparse COO' weight as (dense values, mask, bias)."""
    k_w, k_m, k_b = jax.random.split(key, 3)
    dense = jax.random.normal(k_w, (out_features, in_features), jnp.float32) * 0.1
    mask = (jax.random.uniform(k_m, (out_features, in_features)) < density
            ).astype(jnp.float32)
    weight_dense = dense * mask          # what the COO tensor would densify to
    bias = jax.random.normal(k_b, (out_features, 1), jnp.float32) * 0.01
    return weight_dense, mask, bias


if __name__ == "__main__":
    key = jax.random.PRNGKey(0)

    # --- Small demo shapes (exercises the single-block path). ---
    in_features, out_features, batch = 32, 64, 8
    weight_dense, mask, bias = make_sparse_params(key, out_features, in_features)
    params = preprocess_sparse_linear(weight_dense, bias)   # hoisted, reused below

    # transpose=False path: inp (in_features, batch) -> out (out_features, batch)
    x = jax.random.normal(jax.random.fold_in(key, 1),
                          (in_features, batch), jnp.float32)
    out = jax.block_until_ready(sparse_linear_forward(params, x, transpose=False))

    # transpose=True path: inp (batch, in_features) -> out (batch, out_features)
    x_t = jax.random.normal(jax.random.fold_in(key, 2),
                            (batch, in_features), jnp.float32)
    out_t = jax.block_until_ready(sparse_linear_forward(params, x_t, transpose=True))

    # Reference: same bf16 operands / f32 accumulation as the kernel.
    w_bf = weight_dense.astype(jnp.bfloat16)
    ref = jnp.dot(w_bf, x.astype(jnp.bfloat16),
                  preferred_element_type=jnp.float32) + bias
    ref_t = (jnp.dot(w_bf, x_t.astype(jnp.bfloat16).T,
                     preferred_element_type=jnp.float32) + bias).T

    assert out.shape == (out_features, batch)
    assert out_t.shape == (batch, out_features)
    assert jnp.allclose(out, ref, atol=1e-2, rtol=1e-2), \
        float(jnp.max(jnp.abs(out - ref)))
    assert jnp.allclose(out_t, ref_t, atol=1e-2, rtol=1e-2), \
        float(jnp.max(jnp.abs(out_t - ref_t)))

    # --- Larger layer (exercises the tiled grid with K reduction). ---
    in_f2, out_f2, batch2 = 2304, 320, 48
    w2, _, b2 = make_sparse_params(jax.random.fold_in(key, 3), out_f2, in_f2)
    params2 = preprocess_sparse_linear(w2, b2)
    x2 = jax.random.normal(jax.random.fold_in(key, 4),
                           (batch2, in_f2), jnp.float32)
    out2 = jax.block_until_ready(sparse_linear_forward(params2, x2, transpose=True))
    ref2 = (jnp.dot(w2.astype(jnp.bfloat16), x2.astype(jnp.bfloat16).T,
                    preferred_element_type=jnp.float32) + b2).T
    assert out2.shape == (batch2, out_f2)
    assert jnp.allclose(out2, ref2, atol=5e-2, rtol=5e-2), \
        float(jnp.max(jnp.abs(out2 - ref2)))

    print("KERNEL_OK")
</pallas_src>

<mosaic_0001>
module attributes {stable_mosaic.version = 11 : i64} {
  func.func @_sparse_linear_small_kernel(%arg0: memref<16x128xbf16, #tpu.memory_space<vmem>>, %arg1: memref<128x128xbf16, #tpu.memory_space<vmem>>, %arg2: memref<1x128xf32, #tpu.memory_space<vmem>>, %arg3: memref<16x128xf32, #tpu.memory_space<vmem>>) attributes {dimension_semantics = [], scalar_prefetch = 0 : i64, scratch_operands = 0 : i64, tpu.core_type = #tpu.core_type<tc>} {
    %c0 = arith.constant 0 : index
    %c0_0 = arith.constant 0 : index
    %0 = vector.load %arg0[%c0, %c0_0] : memref<16x128xbf16, #tpu.memory_space<vmem>>, vector<16x128xbf16>
    %c0_1 = arith.constant 0 : index
    %c0_2 = arith.constant 0 : index
    %1 = vector.load %arg1[%c0_1, %c0_2] : memref<128x128xbf16, #tpu.memory_space<vmem>>, vector<128x128xbf16>
    %cst = arith.constant dense<0.000000e+00> : vector<16x128xf32>
    %2 = tpu.matmul %0, %1, %cst {dimension_numbers = #tpu.dot_dimension_numbers<[1], [0], [0], [1], [0, 0, 1, 1], [], []>} : vector<16x128xbf16>, vector<128x128xbf16>, vector<16x128xf32> -> vector<16x128xf32>
    %c0_3 = arith.constant 0 : index
    %c0_4 = arith.constant 0 : index
    %3 = vector.load %arg2[%c0_3, %c0_4] : memref<1x128xf32, #tpu.memory_space<vmem>>, vector<1x128xf32>
    %4 = vector.broadcast %3 : vector<1x128xf32> to vector<16x128xf32>
    %5 = arith.addf %2, %4 : vector<16x128xf32>
    %c0_5 = arith.constant 0 : index
    %c0_6 = arith.constant 0 : index
    %6 = vector.load %arg3[%c0_5, %c0_6] : memref<16x128xf32, #tpu.memory_space<vmem>>, vector<16x128xf32>
    tpu.vector_store %arg3[%c0_5, %c0_6], %5 {strides = array<i32>} : memref<16x128xf32, #tpu.memory_space<vmem>>, vector<16x128xf32>,
    return
  }
}

</mosaic_0001>

<llo_original>
// kernel: tpu_custom_call.1
$region0: #{tpu_custom_call.1}
  #allocation0 [shape = 'u32[]', space=smem, size = 0x4, offset = 0x4, fixed_abs, tag = 'smem constant byte address 0x4 - core index']
  #allocation1 [shape = 'u32[144,128]{1,0:T(1,128)}', space=vmem, size = 0x12000, scoped, tag = 'internal scratch']
  %s0 = inlined_call_operand.hbm [shape: bf16[16,128], index: 0, kind: input, shape index: {}]
  %s1 = inlined_call_operand.hbm [shape: bf16[128,128], index: 1, kind: input, shape index: {}]
  %s2 = inlined_call_operand.vmem [shape: f32[1,128], index: 2, kind: input, shape index: {}]
  %s3 = inlined_call_operand.hbm [shape: f32[16,128], index: 3, kind: output, shape index: {}]
  %s4 = sld [smem:[#allocation0]]
  $region30: #{tpu_custom_call.1} parent=0
    _
  %s6 = ssub.s32 1, %s4
  %s7 = scalar_select 0, %s6, %s4
  $region1: #{tpu_custom_call.1} parent=0
    #allocation2 [shape = 'u8[4096]{0}', space=vmem, size = 0x1000, scoped, tag = 'input window, operand 0, single buffered']
    #allocation3 [shape = 's32[1]{0}', space=sflag, size = 0x4, scoped, tag = 'scoped memory for tpu_custom_call.1']
    #allocation4 [shape = 's32[1]{0}', space=sflag, size = 0x4, scoped, tag = 'scoped memory for tpu_custom_call.1']
    #allocation5 [shape = 'u8[32768]{0}', space=vmem, size = 0x8000, scoped, tag = 'input window, operand 1, single buffered']
    #allocation6 [shape = 's32[1]{0}', space=sflag, size = 0x4, scoped, tag = 'scoped memory for tpu_custom_call.1']
    #allocation7 [shape = 'u8[8192]{0}', space=vmem, size = 0x2000, scoped, tag = 'output window, operand 0, single buffered']
    %8 = vsyncpa [#allocation3], 0
    %9 = vsyncpa [#allocation6], 0
    %10 = vsyncpa [#allocation4], 0
    // Predicated region
    $region2: #{tpu_custom_call.1} parent=1 // pred_check
      _
    $region3: #{tpu_custom_call.1} parent=1 // pred_check_branch
      %12 = sbr.rel (0) target = $region5
    $region4: #{tpu_custom_call.1} parent=1 // pred_region
      %s14 = ssub.s32 128, 128
      %15 = vsyncadd [#allocation3], %s14
      %s16 = sshll.u32 [#allocation2], 4
      %s17 = int_to_ptr.vmem [resolvable:$true] %s16
      %22 = dma.hbm_to_vmem [thread:$0]  %s0, 128, %s17, [#allocation3], 64, 64, 4
    $region5: #{tpu_custom_call.1} parent=1 // pred_fallthru
      _
    // Predicated region
    $region6: #{tpu_custom_call.1} parent=1 // pred_check
      _
    $region7: #{tpu_custom_call.1} parent=1 // pred_check_branch
      %24 = sbr.rel (0) target = $region9
    $region8: #{tpu_custom_call.1} parent=1 // pred_region
      %s26 = ssub.s32 1024, 1024
      %27 = vsyncadd [#allocation6], %s26
      %s28 = sshll.u32 [#allocation5], 4
      %s29 = int_to_ptr.vmem [resolvable:$true] %s28
      %34 = dma.hbm_to_vmem [thread:$0]  %s1, 1024, %s29, [#allocation6], 64, 64, 4
    $region9: #{tpu_custom_call.1} parent=1 // pred_fallthru
      _
    // Predicated region
    $region10: #{tpu_custom_call.1} parent=1 // pred_check
      _
    $region11: #{tpu_custom_call.1} parent=1 // pred_check_branch
      %36 = sbr.rel (0) target = $region13
    $region12: #{tpu_custom_call.1} parent=1 // pred_region
      _
    $region13: #{tpu_custom_call.1} parent=1 // pred_fallthru
      _
    // Predicated region
    $region14: #{tpu_custom_call.1} parent=1 // pred_check
      _
    $region15: #{tpu_custom_call.1} parent=1 // pred_check_branch
      %38 = sbr.rel (0) target = $region17
    $region16: #{tpu_custom_call.1} parent=1 // pred_region
      %39 = dma.done [#allocation3], 128
    $region17: #{tpu_custom_call.1} parent=1 // pred_fallthru
      _
    // Predicated region
    $region18: #{tpu_custom_call.1} parent=1 // pred_check
      _
    $region19: #{tpu_custom_call.1} parent=1 // pred_check_branch
      %41 = sbr.rel (0) target = $region21
    $region20: #{tpu_custom_call.1} parent=1 // pred_region
      %42 = dma.done [#allocation6], 1024
    $region21: #{tpu_custom_call.1} parent=1 // pred_fallthru
      _
    %v44 = vld [vmem:[#allocation2] sm:$0xf]
    %v45 = vld [vmem:[#allocation2 + $0x4] sm:$0xf]
    %v46 = vld [vmem:[#allocation5] sm:$0xf]
    %v47 = vld [vmem:[#allocation5 + $0x4] sm:$0xf]
    %v48 = vld [vmem:[#allocation5 + $0x8] sm:$0xf]
    %v49 = vld [vmem:[#allocation5 + $0xc] sm:$0xf]
    %v50 = vld [vmem:[#allocation5 + $0x10] sm:$0xf]
    %v51 = vld [vmem:[#allocation5 + $0x14] sm:$0xf]
    %v52 = vld [vmem:[#allocation5 + $0x18] sm:$0xf]
    %v53 = vld [vmem:[#allocation5 + $0x1c] sm:$0xf]
    %v54 = vld [vmem:[#allocation5 + $0x20] sm:$0xf]
    %v55 = vld [vmem:[#allocation5 + $0x24] sm:$0xf]
    %v56 = vld [vmem:[#allocation5 + $0x28] sm:$0xf]
    %v57 = vld [vmem:[#allocation5 + $0x2c] sm:$0xf]
    %v58 = vld [vmem:[#allocation5 + $0x30] sm:$0xf]
    %v59 = vld [vmem:[#allocation5 + $0x34] sm:$0xf]
    %v60 = vld [vmem:[#allocation5 + $0x38] sm:$0xf]
    %v61 = vld [vmem:[#allocation5 + $0x3c] sm:$0xf]
    %v62 = vld [vmem:[%s2] sm:$0x1]
    %v64 = vlaneseq
    %v65 = vshrl.u32 %v64, 7
    %v66 = vsub.s32 0, %v65
    %v67 = vrot.slane %v62, %v66
    %v71 = vunpack.c.l.b16 %v44
    %v72 = vunpack.c.l.b16 %v45
    %v73 = vpack.c.b16 %v72, %v71
    %v91 = vunpack.c.l.b16 %v46
    %v92 = vunpack.c.l.b16 %v47
    %v93 = vunpack.c.l.b16 %v48
    %v94 = vunpack.c.l.b16 %v49
    %v95 = vunpack.c.l.b16 %v50
    %v96 = vunpack.c.l.b16 %v51
    %v97 = vunpack.c.l.b16 %v52
    %v98 = vunpack.c.l.b16 %v53
    %v99 = vunpack.c.l.b16 %v54
    %v100 = vunpack.c.l.b16 %v55
    %v101 = vunpack.c.l.b16 %v56
    %v102 = vunpack.c.l.b16 %v57
    %v103 = vunpack.c.l.b16 %v58
    %v104 = vunpack.c.l.b16 %v59
    %v105 = vunpack.c.l.b16 %v60
    %v106 = vunpack.c.l.b16 %v61
    %v107 = vpack.c.b16 %v92, %v91
    %v108 = vpack.c.b16 %v94, %v93
    %v109 = vpack.c.b16 %v96, %v95
    %v110 = vpack.c.b16 %v98, %v97
    %v111 = vpack.c.b16 %v100, %v99
    %v112 = vpack.c.b16 %v102, %v101
    %v113 = vpack.c.b16 %v104, %v103
    %v114 = vpack.c.b16 %v106, %v105
    %123 = vmatprep.subr.bf16.mxu0 0
    %124 = vmatpush1.bf16.msra.mxu0 %v107
    %125 = vmatprep.subr.bf16.mxu0 0
    %126 = vmatpush1.bf16.msra.mxu0 %v108
    %127 = vmatprep.subr.bf16.mxu0 0
    %128 = vmatpush1.bf16.msra.mxu0 %v109
    %129 = vmatprep.subr.bf16.mxu0 0
    %130 = vmatpush1.bf16.msra.mxu0 %v110
    %131 = vmatprep.subr.bf16.mxu0 0
    %132 = vmatpush1.bf16.msra.mxu0 %v111
    %133 = vmatprep.subr.bf16.mxu0 0
    %134 = vmatpush1.bf16.msra.mxu0 %v112
    %135 = vmatprep.subr.bf16.mxu0 0
    %136 = vmatpush1.bf16.msra.mxu0 %v113
    %137 = vmatprep.subr.bf16.mxu0 0
    %138 = vmatpush1.bf16.msra.mxu0 %v114
    %139 = vmatprep.subr.bf16.mxu0 0
    %140 = vmatpush1.bf16.msra.mxu0 0
    %141 = vmatprep.subr.bf16.mxu0 0
    %142 = vmatpush1.bf16.msra.mxu0 0
    %143 = vmatprep.subr.bf16.mxu0 0
    %144 = vmatpush1.bf16.msra.mxu0 0
    %145 = vmatprep.subr.bf16.mxu0 0
    %146 = vmatpush1.bf16.msra.mxu0 0
    %147 = vmatprep.subr.bf16.mxu0 0
    %148 = vmatpush1.bf16.msra.mxu0 0
    %149 = vmatprep.subr.bf16.mxu0 0
    %150 = vmatpush1.bf16.msra.mxu0 0
    %151 = vmatprep.subr.bf16.mxu0 0
    %152 = vmatpush1.bf16.msra.mxu0 0
    %153 = vmatprep.subr.bf16.mxu0 0
    %154 = vmatpush1.bf16.msra.mxu0 0
    %155 = vmatprep.mubr.bf16.mxu0 0
    %156 = vmatmul.mubr.bf16.gmra.mrb[0].mxu0 %v73
    %v157 = vpop.f32.mrb[0].mxu0
    %v158 = vadd.f32 %v67, %v157
    %v159 = vpop.f32.mrb[0].mxu0
    %v160 = vpop.f32.mrb[0].mxu0
    %v161 = vadd.f32 %v67, %v160
    %v162 = vpop.f32.mrb[0].mxu0
    %163 = vdwg.mxu0
    %164 = vst [vmem:[#allocation7] sm:$0xff] %v158
    %165 = vst [vmem:[#allocation7 + $0x8] sm:$0xff] %v161
    // Predicated region
    $region22: #{tpu_custom_call.1} parent=1 // pred_check
      _
    $region23: #{tpu_custom_call.1} parent=1 // pred_check_branch
      %167 = sbr.rel (0) target = $region25
    $region24: #{tpu_custom_call.1} parent=1 // pred_region
      %s169 = ssub.s32 256, 256
      %170 = vsyncadd [#allocation4], %s169
      %s171 = sshll.u32 [#allocation7], 4
      %s172 = int_to_ptr.vmem [resolvable:$true] %s171
      %177 = dma.vmem_to_hbm [thread:$0]  %s172, 256, %s3, [#allocation4], 128, 128, 8
    $region25: #{tpu_custom_call.1} parent=1 // pred_fallthru
      _
    // Predicated region
    $region26: #{tpu_custom_call.1} parent=1 // pred_check
      _
    $region27: #{tpu_custom_call.1} parent=1 // pred_check_branch
      %179 = sbr.rel (0) target = $region29
    $region28: #{tpu_custom_call.1} parent=1 // pred_region
      %180 = dma.done [#allocation4], 256
    $region29: #{tpu_custom_call.1} parent=1 // pred_fallthru
      _
    %181 = vsyncpa [#allocation3], 1
    %182 = vsyncpa [#allocation6], 1
    %183 = vsyncpa [#allocation4], 1

</llo_original>
